<compile_context>
chip_gen: v7x
topology: tpu7x:2x2x1
jax: 0.10.0
libtpu: 0.0.40
codegen_flags: <defaults>
</compile_context>

<pallas_src>
import numpy as np
import jax
import jax.numpy as jnp
from jax.experimental import pallas as pl
from jax.experimental.pallas import tpu as pltpu


def _ses_kernel(w_ref, x_ref, out_ref):
    # w_ref:   (TL, F_in)      precomputed SES level weights for this time tile
    # x_ref:   (TB, TL, F_in)  native-layout input tile (batch, time, feature)
    # out_ref: (TB, F_in)      resident accumulator across the reduction (L) axis
    k = pl.program_id(1)

    @pl.when(k == 0)
    def _():
        out_ref[...] = jnp.zeros_like(out_ref)

    # VPU elementwise multiply + XLU sublane reduce over time.  No MXU needed.
    out_ref[...] += jnp.sum(x_ref[...] * w_ref[...][None, :, :], axis=1)


def _tuning():
    """Per-generation block-byte budget and scoped-VMEM override."""
    kind = ""
    try:
        kind = jax.devices()[0].device_kind.lower()
    except Exception:
        pass
    if "v5 lite" in kind or "v5e" in kind or "v5litepod" in kind:
        # Stay inside v5e's 16 MiB default scoped VMEM (2 bufs x block + weights).
        return 3 << 20, None
    # v6e / v7x (and unknown): bigger blocks, raise the scoped VMEM limit.
    # 48 MiB is within v7x's 64 MiB physical VMEM and trivially within v6e's 128 MiB.
    return 6 << 20, 48 << 20


def _pick_tiles(B, L, F_in, max_block_bytes):
    """Choose (TB, TL).

    Constraints (TPU (8,128) BlockSpec rule):
      * TL must be a multiple of 8 dividing L, or equal to L.
      * TB must be a multiple of 8 dividing B, or equal to B (it is the second-last
        dim of the (TB, F_in) output block).
    Budget is computed against the *padded* VMEM footprint of the x block, and the
    fallback never ignores the budget (picks the smallest legal block instead).
    Prefers >=2 batch grid steps so the pipeline / megacore have work to overlap.
    """
    lane_pad = ((F_in + 127) // 128) * 128

    def padded_bytes(tb, tl):
        return tb * (((tl + 7) // 8) * 8) * lane_pad * 4

    tl_cands = sorted({d for d in range(8, L + 1, 8) if L % d == 0} | {L})
    tb_cands = sorted({d for d in range(8, B + 1, 8) if B % d == 0} | {B})

    best = None
    for tb in tb_cands:
        for tl in tl_cands:
            nbytes = padded_bytes(tb, tl)
            fits = nbytes <= max_block_bytes
            nsteps_b = B // tb
            # Prefer: fits the budget, then >=4 (>=2) batch grid steps, then the
            # largest fitting block (or the *smallest* block if nothing fits).
            score = (fits, min(nsteps_b, 4), nbytes if fits else -nbytes)
            if best is None or score > best[0]:
                best = (score, tb, tl)
    return best[1], best[2]


def exponential_smoothing_forecast(x, best_alphas, output_length, output_dim):
    """x: (B, L, F_in); best_alphas: (F_in,).  Returns (B, output_length, output_dim) f32."""
    x = x.astype(jnp.float32)
    B, L, F_in = x.shape

    max_block_bytes, vmem_limit = _tuning()
    TB, TL = _pick_tiles(B, L, F_in, max_block_bytes)

    # --- precompute SES level weights in plain JAX (hoisted out of the kernel) ---
    # l_{L-1} = (1-a)^(L-1) x_0 + sum_{t>=1} a (1-a)^(L-1-t) x_t
    a = best_alphas.astype(jnp.float32)                    # (F_in,)
    om = 1.0 - a
    t = jnp.arange(L, dtype=jnp.float32)[:, None]          # (L, 1)
    expo = jnp.float32(L - 1) - t                          # (L, 1)
    decay = jnp.where(expo == 0.0, 1.0,                    # safe 0^0 when alpha == 1
                      jnp.power(om[None, :], expo))        # (L, F_in)
    w = jnp.where(t == 0.0, decay, a[None, :] * decay)     # (L, F_in)

    compiler_params = pltpu.CompilerParams(
        dimension_semantics=("parallel", "arbitrary"),
        **({"vmem_limit_bytes": vmem_limit} if vmem_limit is not None else {}),
    )

    cost = pl.CostEstimate(
        flops=2 * B * L * F_in,
        transcendentals=0,
        bytes_accessed=4 * (B * L * F_in + L * F_in + B * F_in),
    )

    level = pl.pallas_call(
        _ses_kernel,
        out_shape=jax.ShapeDtypeStruct((B, F_in), jnp.float32),
        grid=(B // TB, L // TL),                           # reduction axis (L) last
        in_specs=[
            pl.BlockSpec((TL, F_in), lambda b, k: (k, 0)),          # weights tile
            pl.BlockSpec((TB, TL, F_in), lambda b, k: (b, k, 0)),   # x tile (native layout)
        ],
        out_specs=pl.BlockSpec((TB, F_in), lambda b, k: (b, 0)),    # resident accumulator
        compiler_params=compiler_params,
        cost_estimate=cost,
    )(w, x)                                                # level: (B, F_in)

    # --- module's feature mapping + flat-forecast broadcast (plain JAX, XLA fuses) ---
    if output_dim <= F_in:
        cols = jnp.arange(output_dim)                      # first output_dim features
    else:
        cols = jnp.arange(output_dim) % F_in               # out_idx % input_dim
    mapped = jnp.take(level, cols, axis=1)                 # (B, F_out)
    return jnp.broadcast_to(mapped[:, None, :],
                            (B, output_length, output_dim)).astype(jnp.float32)


if __name__ == "__main__":
    key = jax.random.PRNGKey(0)
    B, L, F_in = 2, 16, 4          # batch, input_length, input_dim
    H, F_out = 8, 6                # output_length, output_dim (exercises % mapping)

    x = jax.random.normal(key, (B, L, F_in), dtype=jnp.float32)
    best_alphas = jnp.full((F_in,), 0.3, dtype=jnp.float32)   # == register_buffer init

    fwd = jax.jit(exponential_smoothing_forecast, static_argnums=(2, 3))
    y = fwd(x, best_alphas, H, F_out)
    y = jax.block_until_ready(y)

    # Pure-numpy reference: sequential fixed-alpha recursion + feature mapping.
    xn = np.asarray(x, dtype=np.float64)
    alpha = 0.3
    lv = xn[:, 0, :].copy()
    for tt in range(1, L):
        lv = alpha * xn[:, tt, :] + (1.0 - alpha) * lv
    cols = [o % F_in for o in range(F_out)] if F_out > F_in else list(range(F_out))
    ref = np.repeat(lv[:, None, :], H, axis=1)[:, :, cols].astype(np.float32)

    assert y.shape == (B, H, F_out) and y.dtype == jnp.float32
    np.testing.assert_allclose(np.asarray(y), ref, rtol=1e-5, atol=1e-5)
    print("KERNEL_OK")
</pallas_src>

<mosaic_0001>
module attributes {stable_mosaic.version = 11 : i64} {
  func.func @_ses_kernel(%arg0: i32, %arg1: i32, %arg2: memref<16x4xf32, #tpu.memory_space<vmem>>, %arg3: memref<2x16x4xf32, #tpu.memory_space<vmem>>, %arg4: memref<2x4xf32, #tpu.memory_space<vmem>>) attributes {dimension_semantics = [#tpu.dimension_semantics<parallel>, #tpu.dimension_semantics<arbitrary>], iteration_bounds = array<i64: 1, 1>, scalar_prefetch = 0 : i64, scratch_operands = 0 : i64, tpu.core_type = #tpu.core_type<tc>, window_params = [{transform_indices = @transform_0, window_bounds = array<i64: 16, 4>}, {transform_indices = @transform_1, window_bounds = array<i64: 2, 16, 4>}, {transform_indices = @transform_2, window_bounds = array<i64: 2, 4>}]} {
    %c0_i32 = arith.constant 0 : i32
    %0 = arith.cmpi eq, %arg1, %c0_i32 : i32
    %1 = arith.extui %0 : i1 to i32
    %c0_i32_0 = arith.constant 0 : i32
    %2 = arith.cmpi ne, %1, %c0_i32_0 : i32
    scf.if %2 {
      %cst_9 = arith.constant 0.000000e+00 : f32
      %12 = vector.broadcast %cst_9 : f32 to vector<2x4xf32>
      %c0_10 = arith.constant 0 : index
      %c0_11 = arith.constant 0 : index
      %13 = vector.load %arg4[%c0_10, %c0_11] : memref<2x4xf32, #tpu.memory_space<vmem>>, vector<2x4xf32>
      tpu.vector_store %arg4[%c0_10, %c0_11], %12 {strides = array<i32>} : memref<2x4xf32, #tpu.memory_space<vmem>>, vector<2x4xf32>,
    } else {
    }
    %c0 = arith.constant 0 : index
    %c0_1 = arith.constant 0 : index
    %3 = vector.load %arg4[%c0, %c0_1] : memref<2x4xf32, #tpu.memory_space<vmem>>, vector<2x4xf32>
    %c0_2 = arith.constant 0 : index
    %c0_3 = arith.constant 0 : index
    %c0_4 = arith.constant 0 : index
    %4 = vector.load %arg3[%c0_2, %c0_3, %c0_4] : memref<2x16x4xf32, #tpu.memory_space<vmem>>, vector<2x16x4xf32>
    %c0_5 = arith.constant 0 : index
    %c0_6 = arith.constant 0 : index
    %5 = vector.load %arg2[%c0_5, %c0_6] : memref<16x4xf32, #tpu.memory_space<vmem>>, vector<16x4xf32>
    %6 = vector.shape_cast %5 : vector<16x4xf32> to vector<1x16x4xf32>
    %7 = vector.broadcast %6 : vector<1x16x4xf32> to vector<2x16x4xf32>
    %8 = arith.mulf %4, %7 : vector<2x16x4xf32>
    %cst = arith.constant dense<0.000000e+00> : vector<2x4xf32>
    %9 = vector.multi_reduction <add>, %8, %cst [1] : vector<2x16x4xf32> to vector<2x4xf32>
    %10 = arith.addf %3, %9 : vector<2x4xf32>
    %c0_7 = arith.constant 0 : index
    %c0_8 = arith.constant 0 : index
    %11 = vector.load %arg4[%c0_7, %c0_8] : memref<2x4xf32, #tpu.memory_space<vmem>>, vector<2x4xf32>
    tpu.vector_store %arg4[%c0_7, %c0_8], %10 {strides = array<i32>} : memref<2x4xf32, #tpu.memory_space<vmem>>, vector<2x4xf32>,
    return
  }
  func.func @transform_0(%arg0: i32, %arg1: i32) -> (i32, i32) {
    %c0_i32 = arith.constant 0 : i32
    %c0_i32_0 = arith.constant 0 : i32
    return %arg1, %c0_i32 : i32, i32
  }
  func.func @transform_1(%arg0: i32, %arg1: i32) -> (i32, i32, i32) {
    %c0_i32 = arith.constant 0 : i32
    %c0_i32_0 = arith.constant 0 : i32
    return %arg0, %arg1, %c0_i32 : i32, i32, i32
  }
  func.func @transform_2(%arg0: i32, %arg1: i32) -> (i32, i32) {
    %c0_i32 = arith.constant 0 : i32
    %c0_i32_0 = arith.constant 0 : i32
    return %arg0, %c0_i32 : i32, i32
  }
}

</mosaic_0001>

<llo_original>
// kernel: exponential_smoothing_forecast.1
$region0: #{exponential_smoothing_forecast.1}
  #allocation0 [shape = 'u32[]', space=smem, size = 0x4, offset = 0x4, fixed_abs, tag = 'smem constant byte address 0x4 - core index']
  #allocation1 [shape = 'u32[144,128]{1,0:T(1,128)}', space=vmem, size = 0x12000, scoped, tag = 'internal scratch']
  %s0 = inlined_call_operand.vmem [shape: f32[16,4], index: 0, kind: input, shape index: {}]
  %s1 = inlined_call_operand.vmem [shape: f32[2,16,4], index: 1, kind: input, shape index: {}]
  %s2 = inlined_call_operand.vmem [shape: f32[2,4], index: 2, kind: output, shape index: {}]
  %s3 = sld [smem:[#allocation0]]
  $region22: #{exponential_smoothing_forecast.1} parent=0
    _
  %s5 = ssub.s32 1, %s3
  %s6 = scalar_select 0, %s5, %s3
  // Predicated region
  $region2: #{exponential_smoothing_forecast.1} parent=0 // pred_check
    _
  $region3: #{exponential_smoothing_forecast.1} parent=0 // pred_check_branch
    %8 = sbr.rel (0) target = $region5
  $region4: #{exponential_smoothing_forecast.1} parent=0 // pred_region
    _
  $region5: #{exponential_smoothing_forecast.1} parent=0 // pred_fallthru
    _
  // Predicated region
  $region6: #{exponential_smoothing_forecast.1} parent=0 // pred_check
    _
  $region7: #{exponential_smoothing_forecast.1} parent=0 // pred_check_branch
    %10 = sbr.rel (0) target = $region9
  $region8: #{exponential_smoothing_forecast.1} parent=0 // pred_region
    _
  $region9: #{exponential_smoothing_forecast.1} parent=0 // pred_fallthru
    _
  %p11 = scmp.eq.s32.totalorder 0, 0
  // Predicated region
  $region10: #{exponential_smoothing_forecast.1} parent=0 // pred_check
    %p12 = pneg %p11
  $region11: #{exponential_smoothing_forecast.1} parent=0 // pred_check_branch
    %14 = sbr.rel (%p12) target = $region13
  $region12: #{exponential_smoothing_forecast.1} parent=0 // pred_region
    %vm15 = vcmask 25600
    %16 = vst.msk [vmem:[%s2] sm:$0x3] %vm15, 0.0
  $region13: #{exponential_smoothing_forecast.1} parent=0 // pred_fallthru
    _
  %v17 = vld [vmem:[%s2] sm:$0x3]
  %v18 = vld [vmem:[%s1] sm:$0xff]
  %v19 = vld [vmem:[%s1 + $0x8] sm:$0xff]
  %v20 = vld [vmem:[%s1 + $0x10] sm:$0xff]
  %v21 = vld [vmem:[%s1 + $0x18] sm:$0xff]
  %v22 = vld [vmem:[%s0] sm:$0xff]
  %v23 = vld [vmem:[%s0 + $0x8] sm:$0xff]
  %v24 = vmul.f32 %v18, %v22
  %v25 = vmul.f32 %v19, %v23
  %v26 = vmul.f32 %v20, %v22
  %v27 = vmul.f32 %v21, %v23
  %vm28 = vcmask 31744
  %v29 = vsel %vm28, %v24, 0.0
  %v30 = vsel %vm28, %v25, 0.0
  %v31 = vadd.f32 %v29, %v30
  %v32 = vrot.slane %v31, 4
  %v33 = vadd.f32 %v31, %v32
  %v34 = vrot.slane %v33, 2
  %v35 = vadd.f32 %v33, %v34
  %v36 = vrot.slane %v35, 1
  %v37 = vadd.f32 %v35, %v36
  %v38 = vsel %vm28, %v26, 0.0
  %v39 = vsel %vm28, %v27, 0.0
  %v40 = vadd.f32 %v38, %v39
  %v41 = vrot.slane %v40, 4
  %v42 = vadd.f32 %v40, %v41
  %v43 = vrot.slane %v42, 2
  %v44 = vadd.f32 %v42, %v43
  %v45 = vrot.slane %v44, 1
  %v46 = vadd.f32 %v44, %v45
  %vm49 = vcmask 1041409
  %v50 = vsel %vm49, %v46, %v37
  %v52 = vadd.f32 %v17, %v50
  %vm53 = vcmask 25600
  %54 = vst.msk [vmem:[%s2] sm:$0x3] %vm53, %v52
  // Predicated region
  $region14: #{exponential_smoothing_forecast.1} parent=0 // pred_check
    _
  $region15: #{exponential_smoothing_forecast.1} parent=0 // pred_check_branch
    %56 = sbr.rel (0) target = $region17
  $region16: #{exponential_smoothing_forecast.1} parent=0 // pred_region
    _
  $region17: #{exponential_smoothing_forecast.1} parent=0 // pred_fallthru
    _
  // Predicated region
  $region18: #{exponential_smoothing_forecast.1} parent=0 // pred_check
    _
  $region19: #{exponential_smoothing_forecast.1} parent=0 // pred_check_branch
    %58 = sbr.rel (0) target = $region21
  $region20: #{exponential_smoothing_forecast.1} parent=0 // pred_region
    _
  $region21: #{exponential_smoothing_forecast.1} parent=0 // pred_fallthru
    _

</llo_original>
